<compile_context>
chip_gen: v5e
topology: v5e:2x2
jax: 0.10.0
libtpu: 0.0.40
codegen_flags: <defaults>
</compile_context>

<pallas_src>
import functools

import jax
import jax.numpy as jnp
from jax.experimental import pallas as pl
from jax.experimental.pallas import tpu as pltpu


def _mse_kernel(x_ref, y_ref, o_ref, acc_ref, *,
                n_rows, block_rows, acc_rows, num_row_blocks,
                inner_blocks, inv_total, needs_mask):
    """Streaming sum((x-y)^2) with a small carried f32 accumulator."""
    c = pl.program_id(0)          # outer axis (split across TensorCores)
    i = pl.program_id(1)          # inner carried-accumulator axis

    @pl.when(i == 0)
    def _():
        acc_ref[...] = jnp.zeros_like(acc_ref)

    diff = x_ref[...].astype(jnp.float32) - y_ref[...].astype(jnp.float32)
    sq = diff * diff

    block_idx = c * inner_blocks + i   # logical row-block index

    def _partial(v):
        # Fold (block_rows, d) down to the (acc_rows, d) accumulator shape
        # with pure VPU adds over 8-row groups (no cross-lane XLU work).
        if block_rows == acc_rows:
            return v
        g = block_rows // acc_rows
        return jnp.sum(v.reshape(g, acc_rows, v.shape[-1]), axis=0)

    if needs_mask:
        # Unmasked fast path for all full, in-range blocks.
        @pl.when(block_idx < num_row_blocks - 1)
        def _():
            acc_ref[...] += _partial(sq)

        # Masked path: the partial tail block and any padded grid steps.
        @pl.when(block_idx >= num_row_blocks - 1)
        def _():
            row_ids = jax.lax.broadcasted_iota(jnp.int32, sq.shape, 0)
            global_rows = block_idx * block_rows + row_ids
            sq_m = jnp.where(global_rows < n_rows, sq, jnp.float32(0.0))
            acc_ref[...] += _partial(sq_m)
    else:
        acc_ref[...] += _partial(sq)

    @pl.when(i == pl.num_programs(1) - 1)
    def _():
        o_ref[0, 0] = jnp.sum(acc_ref[...]) * jnp.float32(inv_total)


def _lane_dense_2d(x, y):
    """Reshape to a lane-dense (multiple-of-128 last dim) slab when possible."""
    n, d = x.shape
    if d % 128 == 0:
        return x, y
    total = n * d
    for w in (1024, 512, 256, 128):
        if total % w == 0:
            return x.reshape(total // w, w), y.reshape(total // w, w)
    # TODO(synk): fully ragged element counts keep the original (n, d) layout;
    # a sub-128 / non-multiple last dim wastes some lanes and HBM bandwidth.
    return x, y


def mse_loss(x, y, *, block_rows=None):
    """Scalar MSE loss mean((x - y)**2) computed with a Pallas TPU kernel.

    x, y: (N, D) arrays (f32 / bf16 / int8), arbitrary N and D.
    Returns a float32 scalar.
    """
    assert x.shape == y.shape and x.ndim == 2
    total_elems = x.shape[0] * x.shape[1]

    x, y = _lane_dense_2d(x, y)
    n, d = x.shape
    itemsize = jnp.dtype(x.dtype).itemsize
    row_align = 8 * (4 // itemsize)          # f32 -> 8, bf16 -> 16, int8 -> 32

    # --- Generation-aware VMEM budget --------------------------------------
    try:
        vmem_cap = int(pltpu.get_tpu_info().vmem_capacity_bytes)
    except Exception:
        vmem_cap = 64 * 1024 * 1024          # conservative (v7x-sized) default
    budget = min(int(vmem_cap * 0.70), 80 * 1024 * 1024)

    acc_bytes = 8 * d * 4                    # small fixed accumulator
    per_row_bytes = 4 * d * itemsize         # 2 inputs x 2 pipeline buffers
    rows_cap = max(row_align,
                   (max(budget - acc_bytes, per_row_bytes) // per_row_bytes
                    // row_align) * row_align)

    if block_rows is None:
        rows = rows_cap
    else:
        rows = max(row_align, -(-int(block_rows) // row_align) * row_align)
        rows = min(rows, rows_cap)
    if rows >= n:
        rows = n                             # single full-extent block

    acc_rows = 8 if rows % 8 == 0 else rows
    num_blocks = -(-n // rows)               # cdiv
    num_outer = 2 if num_blocks >= 2 else 1  # split across TCs on v7x
    inner = -(-num_blocks // num_outer)
    needs_mask = (n % rows != 0) or (num_outer * inner != num_blocks)

    vmem_needed = 2 * 2 * rows * d * itemsize + acc_rows * d * 4
    vmem_limit = int(min(vmem_cap - 2 * 1024 * 1024,
                         max(vmem_needed + 4 * 1024 * 1024,
                             16 * 1024 * 1024)))

    def _in_map(c, i):
        # Clamp padded grid steps to the last valid block; their contribution
        # is zeroed in-kernel via the logical-block-index mask.
        return (jnp.minimum(c * inner + i, num_blocks - 1), 0)

    kernel = functools.partial(
        _mse_kernel,
        n_rows=n,
        block_rows=rows,
        acc_rows=acc_rows,
        num_row_blocks=num_blocks,
        inner_blocks=inner,
        inv_total=1.0 / float(total_elems),
        needs_mask=needs_mask,
    )

    partials = pl.pallas_call(
        kernel,
        out_shape=jax.ShapeDtypeStruct((num_outer, 1), jnp.float32),
        grid_spec=pltpu.PrefetchScalarGridSpec(
            num_scalar_prefetch=0,
            grid=(num_outer, inner),
            in_specs=[
                pl.BlockSpec((rows, d), _in_map),
                pl.BlockSpec((rows, d), _in_map),
            ],
            # One scalar partial per TensorCore, written on its last inner step.
            out_specs=pl.BlockSpec((1, 1), lambda c, i: (c, 0),
                                   memory_space=pltpu.MemorySpace.SMEM),
            # Small fixed f32 accumulator carried across the inner axis.
            scratch_shapes=[pltpu.VMEM((acc_rows, d), jnp.float32)],
        ),
        compiler_params=pltpu.CompilerParams(
            dimension_semantics=("parallel", "arbitrary"),
            vmem_limit_bytes=vmem_limit,
        ),
    )(x, y)

    return jnp.sum(partials)


if __name__ == "__main__":
    key = jax.random.PRNGKey(0)
    k1, k2 = jax.random.split(key)

    # 1) Small deterministic example: single full-extent block path.
    N, D = 16, 256
    x = jax.random.normal(k1, (N, D), dtype=jnp.float32)
    y = jax.random.normal(k2, (N, D), dtype=jnp.float32)
    out = jax.block_until_ready(mse_loss(x, y))
    ref = jnp.mean((x - y) ** 2)
    assert jnp.allclose(out, ref, rtol=1e-5, atol=1e-5), (out, ref)

    # 2) Multi-block + tail-mask + padded two-core grid path
    #    (N not divisible by the forced small row block).
    N2, D2 = 20, 384
    x2 = jax.random.normal(k1, (N2, D2), dtype=jnp.float32)
    y2 = jax.random.normal(k2, (N2, D2), dtype=jnp.float32)
    out2 = jax.block_until_ready(mse_loss(x2, y2, block_rows=8))
    ref2 = jnp.mean((x2 - y2) ** 2)
    assert jnp.allclose(out2, ref2, rtol=1e-5, atol=1e-5), (out2, ref2)

    # 3) bf16 inputs: 16-row-aligned blocks, f32 accumulation.
    N3, D3 = 24, 256
    x3 = jax.random.normal(k1, (N3, D3), dtype=jnp.float32).astype(jnp.bfloat16)
    y3 = jax.random.normal(k2, (N3, D3), dtype=jnp.float32).astype(jnp.bfloat16)
    out3 = jax.block_until_ready(mse_loss(x3, y3, block_rows=16))
    ref3 = jnp.mean((x3.astype(jnp.float32) - y3.astype(jnp.float32)) ** 2)
    assert jnp.allclose(out3, ref3, rtol=1e-5, atol=1e-5), (out3, ref3)

    print("KERNEL_OK")
</pallas_src>

<mosaic_0001>
module attributes {stable_mosaic.version = 11 : i64} {
  func.func @_mse_kernel(%arg0: i32, %arg1: i32, %arg2: memref<16x256xf32, #tpu.memory_space<vmem>>, %arg3: memref<16x256xf32, #tpu.memory_space<vmem>>, %arg4: memref<1x1xf32, #tpu.memory_space<smem>>, %arg5: memref<8x256xf32, #tpu.memory_space<vmem>>) attributes {dimension_semantics = [#tpu.dimension_semantics<parallel>, #tpu.dimension_semantics<arbitrary>], iteration_bounds = array<i64: 1, 1>, scalar_prefetch = 0 : i64, scratch_operands = 1 : i64, tpu.core_type = #tpu.core_type<tc>, window_params = [{transform_indices = @transform_0, window_bounds = array<i64: 16, 256>}, {transform_indices = @transform_1, window_bounds = array<i64: 16, 256>}, {transform_indices = @transform_2, window_bounds = array<i64: 1, 1>}]} {
    %c0_i32 = arith.constant 0 : i32
    %0 = arith.cmpi eq, %arg1, %c0_i32 : i32
    %1 = arith.extui %0 : i1 to i32
    %c0_i32_0 = arith.constant 0 : i32
    %2 = arith.cmpi ne, %1, %c0_i32_0 : i32
    scf.if %2 {
      %cst_10 = arith.constant 0.000000e+00 : f32
      %15 = vector.broadcast %cst_10 : f32 to vector<8x256xf32>
      %c0_11 = arith.constant 0 : index
      %c0_12 = arith.constant 0 : index
      %16 = vector.load %arg5[%c0_11, %c0_12] : memref<8x256xf32, #tpu.memory_space<vmem>>, vector<8x256xf32>
      tpu.vector_store %arg5[%c0_11, %c0_12], %15 {strides = array<i32>} : memref<8x256xf32, #tpu.memory_space<vmem>>, vector<8x256xf32>,
    } else {
    }
    %c0 = arith.constant 0 : index
    %c0_1 = arith.constant 0 : index
    %3 = vector.load %arg2[%c0, %c0_1] : memref<16x256xf32, #tpu.memory_space<vmem>>, vector<16x256xf32>
    %c0_2 = arith.constant 0 : index
    %c0_3 = arith.constant 0 : index
    %4 = vector.load %arg3[%c0_2, %c0_3] : memref<16x256xf32, #tpu.memory_space<vmem>>, vector<16x256xf32>
    %5 = arith.subf %3, %4 : vector<16x256xf32>
    %6 = arith.mulf %5, %5 : vector<16x256xf32>
    %c0_4 = arith.constant 0 : index
    %c0_5 = arith.constant 0 : index
    %7 = vector.load %arg5[%c0_4, %c0_5] : memref<8x256xf32, #tpu.memory_space<vmem>>, vector<8x256xf32>
    %8 = vector.shape_cast %6 : vector<16x256xf32> to vector<2x8x256xf32>
    %cst = arith.constant dense<0.000000e+00> : vector<8x256xf32>
    %9 = vector.multi_reduction <add>, %8, %cst [0] : vector<2x8x256xf32> to vector<8x256xf32>
    %10 = arith.addf %7, %9 : vector<8x256xf32>
    %c0_6 = arith.constant 0 : index
    %c0_7 = arith.constant 0 : index
    %11 = vector.load %arg5[%c0_6, %c0_7] : memref<8x256xf32, #tpu.memory_space<vmem>>, vector<8x256xf32>
    tpu.vector_store %arg5[%c0_6, %c0_7], %10 {strides = array<i32>} : memref<8x256xf32, #tpu.memory_space<vmem>>, vector<8x256xf32>,
    %c0_i32_8 = arith.constant 0 : i32
    %12 = arith.cmpi eq, %arg1, %c0_i32_8 : i32
    %13 = arith.extui %12 : i1 to i32
    %c0_i32_9 = arith.constant 0 : i32
    %14 = arith.cmpi ne, %13, %c0_i32_9 : i32
    scf.if %14 {
      %c0_10 = arith.constant 0 : index
      %c0_11 = arith.constant 0 : index
      %15 = vector.load %arg5[%c0_10, %c0_11] : memref<8x256xf32, #tpu.memory_space<vmem>>, vector<8x256xf32>
      %16 = vector.shape_cast %15 : vector<8x256xf32> to vector<1x8x256xf32>
      %cst_12 = arith.constant dense<0.000000e+00> : vector<1xf32>
      %17 = vector.multi_reduction <add>, %16, %cst_12 [1, 2] : vector<1x8x256xf32> to vector<1xf32>
      %18 = vector.shape_cast %17 : vector<1xf32> to vector<1x1x1xf32>
      %19 = vector.extract %18[0, 0, 0] : f32 from vector<1x1x1xf32>
      %cst_13 = arith.constant 2.44140625E-4 : f32
      %20 = arith.mulf %19, %cst_13 : f32
      %c0_14 = arith.constant 0 : index
      %c0_15 = arith.constant 0 : index
      %21 = memref.load %arg4[%c0_14, %c0_15] : memref<1x1xf32, #tpu.memory_space<smem>>
      memref.store %20, %arg4[%c0_14, %c0_15] : memref<1x1xf32, #tpu.memory_space<smem>>
    } else {
    }
    return
  }
  func.func @transform_0(%arg0: i32, %arg1: i32) -> (i32, i32) {
    %c1_i32 = arith.constant 1 : i32
    %0 = arith.muli %arg0, %c1_i32 : i32
    %1 = arith.addi %0, %arg1 : i32
    %c0_i32 = arith.constant 0 : i32
    %2 = arith.minsi %1, %c0_i32 : i32
    %c0_i32_0 = arith.constant 0 : i32
    %c0_i32_1 = arith.constant 0 : i32
    return %2, %c0_i32_0 : i32, i32
  }
  func.func @transform_1(%arg0: i32, %arg1: i32) -> (i32, i32) {
    %c1_i32 = arith.constant 1 : i32
    %0 = arith.muli %arg0, %c1_i32 : i32
    %1 = arith.addi %0, %arg1 : i32
    %c0_i32 = arith.constant 0 : i32
    %2 = arith.minsi %1, %c0_i32 : i32
    %c0_i32_0 = arith.constant 0 : i32
    %c0_i32_1 = arith.constant 0 : i32
    return %2, %c0_i32_0 : i32, i32
  }
  func.func @transform_2(%arg0: i32, %arg1: i32) -> (i32, i32) {
    %c0_i32 = arith.constant 0 : i32
    %c0_i32_0 = arith.constant 0 : i32
    return %arg0, %c0_i32 : i32, i32
  }
}

</mosaic_0001>

<llo_original>
// kernel: tpu_custom_call.1
$region0: #{tpu_custom_call.1}
  #allocation0 [shape = 'u32[]', space=smem, size = 0x4, offset = 0x4, fixed_abs, tag = 'smem constant byte address 0x4 - core index']
  #allocation1 [shape = 'u32[72,128]{1,0:T(1,128)}', space=vmem, size = 0x9000, scoped, tag = 'internal scratch']
  #allocation2 [shape = 'f32[8,256]{1,0:T(8,128)}', space=vmem, size = 0x2000, scoped, tag = 'scratch operand']
  %s0 = inlined_call_operand.hbm [shape: f32[16,256], index: 0, kind: input, shape index: {}]
  %s1 = inlined_call_operand.hbm [shape: f32[16,256], index: 1, kind: input, shape index: {}]
  %s2 = inlined_call_operand.hbm [shape: f32[1,1], index: 2, kind: output, shape index: {}]
  %s3 = sld [smem:[#allocation0]]
  $region34: #{tpu_custom_call.1} parent=0
    _
  %s5 = ssub.s32 1, %s3
  %s6 = scalar_select 0, %s5, %s3
  $region1: #{tpu_custom_call.1} parent=0
    #allocation3 [shape = 'u8[16384]{0}', space=vmem, size = 0x4000, scoped, tag = 'input window, operand 0, single buffered']
    #allocation4 [shape = 's32[1]{0}', space=sflag, size = 0x4, scoped, tag = 'scoped memory for tpu_custom_call.1']
    #allocation5 [shape = 's32[1]{0}', space=sflag, size = 0x4, scoped, tag = 'scoped memory for tpu_custom_call.1']
    #allocation6 [shape = 'u8[16384]{0}', space=vmem, size = 0x4000, scoped, tag = 'input window, operand 1, single buffered']
    #allocation7 [shape = 's32[1]{0}', space=sflag, size = 0x4, scoped, tag = 'scoped memory for tpu_custom_call.1']
    #allocation8 [shape = 'u8[512]{0}', space=smem, size = 0x200, scoped, tag = 'output window, operand 0, single buffered']
    %7 = vsyncpa [#allocation4], 0
    %8 = vsyncpa [#allocation7], 0
    %9 = vsyncpa [#allocation5], 0
    // Predicated region
    $region2: #{tpu_custom_call.1} parent=1 // pred_check
      _
    $region3: #{tpu_custom_call.1} parent=1 // pred_check_branch
      %11 = sbr.rel (0) target = $region5
    $region4: #{tpu_custom_call.1} parent=1 // pred_region
      %s12 = sadd.s32 0, 0
      %p13 = scmp.lt.s32.totalorder %s12, 0
      %s14 = scalar_select %p13, %s12, 0
      %s15 = smul.u32 2, %s14
      %17 = vsyncadd [#allocation4], 0
      %s18 = smul.addr %s15, 2
      %s19 = smul.addr %s18, 8
      %s20 = scalar_lea.hbm %s0, %s19
      %s21 = sshll.u32 %s20, 4
      %s22 = int_to_ptr.hbm [resolvable:$true] %s21
      %s23 = sshll.u32 [#allocation3], 4
      %s24 = int_to_ptr.vmem [resolvable:$true] %s23
      %29 = dma.hbm_to_vmem [thread:$0]  %s22, 512, %s24, [#allocation4], 256, 256, 16
    $region5: #{tpu_custom_call.1} parent=1 // pred_fallthru
      _
    // Predicated region
    $region6: #{tpu_custom_call.1} parent=1 // pred_check
      _
    $region7: #{tpu_custom_call.1} parent=1 // pred_check_branch
      %31 = sbr.rel (0) target = $region9
    $region8: #{tpu_custom_call.1} parent=1 // pred_region
      %s32 = sadd.s32 0, 0
      %p33 = scmp.lt.s32.totalorder %s32, 0
      %s34 = scalar_select %p33, %s32, 0
      %s35 = smul.u32 2, %s34
      %37 = vsyncadd [#allocation7], 0
      %s38 = smul.addr %s35, 2
      %s39 = smul.addr %s38, 8
      %s40 = scalar_lea.hbm %s1, %s39
      %s41 = sshll.u32 %s40, 4
      %s42 = int_to_ptr.hbm [resolvable:$true] %s41
      %s43 = sshll.u32 [#allocation6], 4
      %s44 = int_to_ptr.vmem [resolvable:$true] %s43
      %49 = dma.hbm_to_vmem [thread:$0]  %s42, 512, %s44, [#allocation7], 256, 256, 16
    $region9: #{tpu_custom_call.1} parent=1 // pred_fallthru
      _
    // Predicated region
    $region10: #{tpu_custom_call.1} parent=1 // pred_check
      _
    $region11: #{tpu_custom_call.1} parent=1 // pred_check_branch
      %51 = sbr.rel (0) target = $region13
    $region12: #{tpu_custom_call.1} parent=1 // pred_region
      %53 = dma.done [#allocation4], 512
    $region13: #{tpu_custom_call.1} parent=1 // pred_fallthru
      _
    // Predicated region
    $region14: #{tpu_custom_call.1} parent=1 // pred_check
      _
    $region15: #{tpu_custom_call.1} parent=1 // pred_check_branch
      %55 = sbr.rel (0) target = $region17
    $region16: #{tpu_custom_call.1} parent=1 // pred_region
      %57 = dma.done [#allocation7], 512
    $region17: #{tpu_custom_call.1} parent=1 // pred_fallthru
      _
    %s58 = sadd.s32 0, 0
    %p59 = scmp.lt.s32.totalorder %s58, 0
    %s60 = scalar_select %p59, %s58, 0
    %s61 = smul.u32 2, %s60
    %s62 = sadd.s32 0, 0
    %p63 = scmp.lt.s32.totalorder %s62, 0
    %s64 = scalar_select %p63, %s62, 0
    %s65 = smul.u32 2, %s64
    %p66 = scmp.eq.s32.totalorder 0, 0
    // Predicated region
    $region18: #{tpu_custom_call.1} parent=1 // pred_check
      %p67 = pneg %p66
    $region19: #{tpu_custom_call.1} parent=1 // pred_check_branch
      %69 = sbr.rel (%p67) target = $region21
    $region20: #{tpu_custom_call.1} parent=1 // pred_region
      %70 = vst [vmem:[#allocation2] sm:$0xff] 0.0
      %71 = vst [vmem:[#allocation2 + $0x8] sm:$0xff] 0.0
    $region21: #{tpu_custom_call.1} parent=1 // pred_fallthru
      _
    %v72 = vld [vmem:[#allocation3] sm:$0xff]
    %v73 = vld [vmem:[#allocation3 + $0x8] sm:$0xff]
    %v74 = vld [vmem:[#allocation3 + $0x10] sm:$0xff]
    %v75 = vld [vmem:[#allocation3 + $0x18] sm:$0xff]
    %v76 = vld [vmem:[#allocation6] sm:$0xff]
    %v77 = vld [vmem:[#allocation6 + $0x8] sm:$0xff]
    %v78 = vld [vmem:[#allocation6 + $0x10] sm:$0xff]
    %v79 = vld [vmem:[#allocation6 + $0x18] sm:$0xff]
    %v80 = vsub.f32 %v72, %v76
    %v81 = vsub.f32 %v73, %v77
    %v82 = vsub.f32 %v74, %v78
    %v83 = vsub.f32 %v75, %v79
    %v84 = vmul.f32 %v80, %v80
    %v85 = vmul.f32 %v81, %v81
    %v86 = vmul.f32 %v82, %v82
    %v87 = vmul.f32 %v83, %v83
    %v88 = vld [vmem:[#allocation2] sm:$0xff]
    %v89 = vld [vmem:[#allocation2 + $0x8] sm:$0xff]
    %v90 = vadd.f32 %v84, %v86
    %v91 = vadd.f32 %v85, %v87
    %v92 = vadd.f32 %v88, %v90
    %v93 = vadd.f32 %v89, %v91
    %94 = vst [vmem:[#allocation2] sm:$0xff] %v92
    %95 = vst [vmem:[#allocation2 + $0x8] sm:$0xff] %v93
    // Predicated region
    $region22: #{tpu_custom_call.1} parent=1 // pred_check
      %p96 = pneg %p66
    $region23: #{tpu_custom_call.1} parent=1 // pred_check_branch
      %98 = sbr.rel (%p96) target = $region25
    $region24: #{tpu_custom_call.1} parent=1 // pred_region
      %v99 = vld [vmem:[#allocation2] sm:$0xff]
      %v100 = vld [vmem:[#allocation2 + $0x8] sm:$0xff]
      %v101 = vadd.f32 %v99, %v100
      %102 = vadd.xlane.f32.xlu0 %v101
      %v103 = vpop.xlane.xlu0 %102
      %v104 = vrot.slane %v103, 4
      %v105 = vadd.f32 %v103, %v104
      %v106 = vrot.slane %v105, 2
      %v107 = vadd.f32 %v105, %v106
      %v108 = vrot.slane %v107, 1
      %v109 = vadd.f32 %v107, %v108
      %s110 = vtos %v109
      %s111 = smul.f32 %s110, 0.00024414063
      %s112 = scalar_lea.smem [#allocation8], 0
      %113 = sst [smem:[%s112]] %s111
    $region25: #{tpu_custom_call.1} parent=1 // pred_fallthru
      _
    // Predicated region
    $region26: #{tpu_custom_call.1} parent=1 // pred_check
      _
    $region27: #{tpu_custom_call.1} parent=1 // pred_check_branch
      %115 = sbr.rel (0) target = $region29
    $region28: #{tpu_custom_call.1} parent=1 // pred_region
      %117 = vsyncadd [#allocation5], 0
      %s119 = sshll.u32 %s2, 4
      %s120 = int_to_ptr.hbm [resolvable:$true] %s119
      %122 = dma.smem_to_hbm [#allocation8], 16, %s120, [#allocation5]
    $region29: #{tpu_custom_call.1} parent=1 // pred_fallthru
      _
    // Predicated region
    $region30: #{tpu_custom_call.1} parent=1 // pred_check
      _
    $region31: #{tpu_custom_call.1} parent=1 // pred_check_branch
      %124 = sbr.rel (0) target = $region33
    $region32: #{tpu_custom_call.1} parent=1 // pred_region
      %126 = dma.done [#allocation5], 16
    $region33: #{tpu_custom_call.1} parent=1 // pred_fallthru
      _
    %127 = sfence
    %128 = vsyncpa [#allocation4], 1
    %129 = vsyncpa [#allocation7], 1
    %130 = vsyncpa [#allocation5], 1

</llo_original>
